<compile_context>
chip_gen: v7x
topology: tpu7x:2x2x1
jax: 0.10.0
libtpu: 0.0.40
codegen_flags: <defaults>
</compile_context>

<pallas_src>
import jax
import jax.numpy as jnp
from jax.experimental import pallas as pl
from jax.experimental.pallas import tpu as pltpu

_LANES = 512                    # lane-dense last dim (multiple of 128)
_TARGET_BLOCK_BYTES = 1 << 20   # ~1 MiB per buffer -> ~6 MiB double-buffered total


def _mul_bias_kernel(bias_ref, x_ref, w_ref, o_ref):
    # bias_ref: SMEM (1,) scalar; x_ref/w_ref/o_ref: VMEM (tm, _LANES) tiles.
    o_ref[...] = (x_ref[...] * w_ref[...] + bias_ref[0]).astype(o_ref.dtype)


def _mul_kernel(x_ref, w_ref, o_ref):
    # is_train=False path: no bias.
    o_ref[...] = (x_ref[...] * w_ref[...]).astype(o_ref.dtype)


def _round_up(a, b):
    return ((a + b - 1) // b) * b


def _pallas_elemwise(x2d, w2d, bias, tm, out_dtype):
    rows, lanes = x2d.shape
    grid = (rows // tm,)
    block = pl.BlockSpec((tm, lanes), lambda i: (i, 0))
    if bias is not None:
        kernel = _mul_bias_kernel
        in_specs = [pl.BlockSpec(memory_space=pltpu.MemorySpace.SMEM), block, block]
        args = (bias, x2d, w2d)
    else:
        kernel = _mul_kernel
        in_specs = [block, block]
        args = (x2d, w2d)
    return pl.pallas_call(
        kernel,
        out_shape=jax.ShapeDtypeStruct((rows, lanes), out_dtype),
        grid=grid,
        in_specs=in_specs,
        out_specs=pl.BlockSpec((tm, lanes), lambda i: (i, 0)),
        compiler_params=pltpu.CompilerParams(
            # "parallel" lets v7x shard grid steps across its 2 TensorCores;
            # measured near-neutral on single-TC v5e/v6e.
            dimension_semantics=("parallel",),
        ),
    )(*args)


def linear_layer_forward(x, weight, bias=None, *, min_pallas_elems=4096,
                         force_pallas=False):
    """Computes x * weight + scalar bias (elementwise), like LinearLayer.forward."""
    out_shape = jnp.broadcast_shapes(x.shape, weight.shape)
    out_dtype = jnp.result_type(x.dtype, weight.dtype)
    total = 1
    for d in out_shape:
        total *= int(d)

    # Tiny problems: Pallas dispatch overhead dwarfs the work; let XLA fuse it.
    if total < min_pallas_elems and not force_pallas:
        out = x.astype(out_dtype) * weight.astype(out_dtype)
        if bias is not None:
            out = out + jnp.asarray(bias).astype(out_dtype)
        return out

    xb = jnp.broadcast_to(x, out_shape).astype(out_dtype)
    wb = jnp.broadcast_to(weight, out_shape).astype(out_dtype)

    itemsize = jnp.dtype(out_dtype).itemsize
    sub = 16 if itemsize == 2 else 8  # sublane multiple (packed dtypes need 16)

    rows_min = pl.cdiv(total, _LANES)
    tm_budget = max(sub, (_TARGET_BLOCK_BYTES // (_LANES * itemsize)) // sub * sub)

    if rows_min <= tm_budget:
        if rows_min >= 2 * sub:
            rows = _round_up(rows_min, 2 * sub)
            tm = rows // 2          # at least 2 grid steps -> both v7x TensorCores
        else:
            rows = _round_up(rows_min, sub)
            tm = rows               # single tiny tile
    else:
        tm = tm_budget              # ~1 MiB buffers: ~85% of HBM roofline territory
        rows = _round_up(rows_min, tm)

    padded_total = rows * _LANES

    def to_2d(a):
        flat = a.reshape(-1)
        if padded_total != total:
            flat = jnp.pad(flat, (0, padded_total - total))
        return flat.reshape(rows, _LANES)

    bias_arr = None
    if bias is not None:
        bias_arr = jnp.asarray(bias, dtype=jnp.float32).reshape((1,))

    out2d = _pallas_elemwise(to_2d(xb), to_2d(wb), bias_arr, tm, out_dtype)
    return out2d.reshape(-1)[:total].reshape(out_shape)


if __name__ == "__main__":
    key = jax.random.PRNGKey(0)
    kx, kw, kb, kx2, kw2 = jax.random.split(key, 5)

    # --- Case 1: shapes from the module (input_size=8, output_size=32) ---------
    input_size, output_size = 8, 32
    x = jax.random.normal(kx, (input_size, output_size), dtype=jnp.float32)
    weight = jax.random.normal(kw, (input_size, output_size), dtype=jnp.float32)
    bias = jax.random.normal(kb, (1,), dtype=jnp.float32)

    # Force the Pallas path even though this size would normally use the
    # XLA-fusion fallback (so the kernel itself is exercised here).
    out = linear_layer_forward(x, weight, bias, force_pallas=True)
    out = jax.block_until_ready(out)
    ref = x * weight + bias[0]
    assert out.shape == (input_size, output_size)
    assert jnp.allclose(out, ref, atol=1e-6, rtol=1e-6), "mismatch vs reference (8x32)"

    # --- Case 2: larger shape exercising multi-step tiling (grid >= 2) ---------
    M2, N2 = 256, 384
    x2 = jax.random.normal(kx2, (M2, N2), dtype=jnp.float32)
    w2 = jax.random.normal(kw2, (M2, N2), dtype=jnp.float32)
    out2 = jax.block_until_ready(linear_layer_forward(x2, w2, bias))
    ref2 = x2 * w2 + bias[0]
    assert jnp.allclose(out2, ref2, atol=1e-6, rtol=1e-6), "mismatch vs reference (256x384)"

    # --- Case 3: is_train=False (no bias) --------------------------------------
    out3 = jax.block_until_ready(linear_layer_forward(x2, w2, None))
    assert jnp.allclose(out3, x2 * w2, atol=1e-6, rtol=1e-6), "mismatch vs reference (no bias)"

    print("KERNEL_OK")
</pallas_src>

<mosaic_0001>
module attributes {stable_mosaic.version = 11 : i64} {
  func.func @_mul_bias_kernel(%arg0: i32, %arg1: memref<1xf32, #tpu.memory_space<smem>>, %arg2: memref<8x512xf32, #tpu.memory_space<vmem>>, %arg3: memref<8x512xf32, #tpu.memory_space<vmem>>, %arg4: memref<8x512xf32, #tpu.memory_space<vmem>>) attributes {dimension_semantics = [#tpu.dimension_semantics<parallel>], iteration_bounds = array<i64: 1>, scalar_prefetch = 0 : i64, scratch_operands = 0 : i64, tpu.core_type = #tpu.core_type<tc>, window_params = [{transform_indices = @transform_0, window_bounds = array<i64: 1>}, {transform_indices = @transform_1, window_bounds = array<i64: 8, 512>}, {transform_indices = @transform_2, window_bounds = array<i64: 8, 512>}, {transform_indices = @transform_3, window_bounds = array<i64: 8, 512>}]} {
    %c0 = arith.constant 0 : index
    %c0_0 = arith.constant 0 : index
    %0 = vector.load %arg2[%c0, %c0_0] : memref<8x512xf32, #tpu.memory_space<vmem>>, vector<8x512xf32>
    %c0_1 = arith.constant 0 : index
    %c0_2 = arith.constant 0 : index
    %1 = vector.load %arg3[%c0_1, %c0_2] : memref<8x512xf32, #tpu.memory_space<vmem>>, vector<8x512xf32>
    %2 = arith.mulf %0, %1 : vector<8x512xf32>
    %c0_3 = arith.constant 0 : index
    %3 = memref.load %arg1[%c0_3] : memref<1xf32, #tpu.memory_space<smem>>
    %4 = vector.broadcast %3 : f32 to vector<8x512xf32>
    %5 = arith.addf %2, %4 : vector<8x512xf32>
    %c0_4 = arith.constant 0 : index
    %c0_5 = arith.constant 0 : index
    %6 = vector.load %arg4[%c0_4, %c0_5] : memref<8x512xf32, #tpu.memory_space<vmem>>, vector<8x512xf32>
    tpu.vector_store %arg4[%c0_4, %c0_5], %5 {strides = array<i32>} : memref<8x512xf32, #tpu.memory_space<vmem>>, vector<8x512xf32>,
    return
  }
  func.func @transform_0(%arg0: i32) -> i32 {
    %c0_i32 = arith.constant 0 : i32
    %c0_i32_0 = arith.constant 0 : i32
    return %c0_i32 : i32
  }
  func.func @transform_1(%arg0: i32) -> (i32, i32) {
    %c0_i32 = arith.constant 0 : i32
    %c0_i32_0 = arith.constant 0 : i32
    return %arg0, %c0_i32 : i32, i32
  }
  func.func @transform_2(%arg0: i32) -> (i32, i32) {
    %c0_i32 = arith.constant 0 : i32
    %c0_i32_0 = arith.constant 0 : i32
    return %arg0, %c0_i32 : i32, i32
  }
  func.func @transform_3(%arg0: i32) -> (i32, i32) {
    %c0_i32 = arith.constant 0 : i32
    %c0_i32_0 = arith.constant 0 : i32
    return %arg0, %c0_i32 : i32, i32
  }
}

</mosaic_0001>

<llo_original>
// kernel: tpu_custom_call.1
$region0: #{tpu_custom_call.1}
  #allocation0 [shape = 'u32[]', space=smem, size = 0x4, offset = 0x4, fixed_abs, tag = 'smem constant byte address 0x4 - core index']
  #allocation1 [shape = 'u32[144,128]{1,0:T(1,128)}', space=vmem, size = 0x12000, scoped, tag = 'internal scratch']
  #allocation2 [shape = 'f32[1]{0:T(128)S(6)}', space=smem, size = 0x200, scoped, tag = 'scoped memory for tpu_custom_call.1']
  %s0 = inlined_call_operand.<no memory space> [shape: f32[1], index: 0, kind: input, shape index: {}]
  %s1 = inlined_call_operand.hbm [shape: f32[8,512], index: 1, kind: input, shape index: {}]
  %s2 = inlined_call_operand.hbm [shape: f32[8,512], index: 2, kind: input, shape index: {}]
  %s3 = inlined_call_operand.hbm [shape: f32[8,512], index: 3, kind: output, shape index: {}]
  %s4 = sld [smem:[#allocation0]]
  $region30: #{tpu_custom_call.1} parent=0
    _
  %s6 = ssub.s32 1, %s4
  %s7 = scalar_select 0, %s6, %s4
  %8 = sst [smem:[#allocation2]] %s0
  $region1: #{tpu_custom_call.1} parent=0
    #allocation3 [shape = 'u8[16384]{0}', space=vmem, size = 0x4000, scoped, tag = 'input window, operand 1, single buffered']
    #allocation4 [shape = 's32[1]{0}', space=sflag, size = 0x4, scoped, tag = 'scoped memory for tpu_custom_call.1']
    #allocation5 [shape = 's32[1]{0}', space=sflag, size = 0x4, scoped, tag = 'scoped memory for tpu_custom_call.1']
    #allocation6 [shape = 'u8[16384]{0}', space=vmem, size = 0x4000, scoped, tag = 'input window, operand 2, single buffered']
    #allocation7 [shape = 's32[1]{0}', space=sflag, size = 0x4, scoped, tag = 'scoped memory for tpu_custom_call.1']
    #allocation8 [shape = 'u8[16384]{0}', space=vmem, size = 0x4000, scoped, tag = 'output window, operand 0, single buffered']
    %9 = vsyncpa [#allocation4], 0
    %10 = vsyncpa [#allocation7], 0
    %11 = vsyncpa [#allocation5], 0
    // Predicated region
    $region2: #{tpu_custom_call.1} parent=1 // pred_check
      _
    $region3: #{tpu_custom_call.1} parent=1 // pred_check_branch
      %13 = sbr.rel (0) target = $region5
    $region4: #{tpu_custom_call.1} parent=1 // pred_region
      _
    $region5: #{tpu_custom_call.1} parent=1 // pred_fallthru
      _
    // Predicated region
    $region6: #{tpu_custom_call.1} parent=1 // pred_check
      _
    $region7: #{tpu_custom_call.1} parent=1 // pred_check_branch
      %15 = sbr.rel (0) target = $region9
    $region8: #{tpu_custom_call.1} parent=1 // pred_region
      %s17 = ssub.s32 512, 512
      %18 = vsyncadd [#allocation4], %s17
      %s20 = sshll.u32 [#allocation3], 4
      %s21 = int_to_ptr.vmem [resolvable:$true] %s20
      %23 = dma.hbm_to_vmem [thread:$0]  %s1, 512, %s21, [#allocation4]
    $region9: #{tpu_custom_call.1} parent=1 // pred_fallthru
      _
    // Predicated region
    $region10: #{tpu_custom_call.1} parent=1 // pred_check
      _
    $region11: #{tpu_custom_call.1} parent=1 // pred_check_branch
      %25 = sbr.rel (0) target = $region13
    $region12: #{tpu_custom_call.1} parent=1 // pred_region
      %s27 = ssub.s32 512, 512
      %28 = vsyncadd [#allocation7], %s27
      %s30 = sshll.u32 [#allocation6], 4
      %s31 = int_to_ptr.vmem [resolvable:$true] %s30
      %33 = dma.hbm_to_vmem [thread:$0]  %s2, 512, %s31, [#allocation7]
    $region13: #{tpu_custom_call.1} parent=1 // pred_fallthru
      _
    // Predicated region
    $region14: #{tpu_custom_call.1} parent=1 // pred_check
      _
    $region15: #{tpu_custom_call.1} parent=1 // pred_check_branch
      %35 = sbr.rel (0) target = $region17
    $region16: #{tpu_custom_call.1} parent=1 // pred_region
      %36 = dma.done [#allocation4], 512
    $region17: #{tpu_custom_call.1} parent=1 // pred_fallthru
      _
    // Predicated region
    $region18: #{tpu_custom_call.1} parent=1 // pred_check
      _
    $region19: #{tpu_custom_call.1} parent=1 // pred_check_branch
      %38 = sbr.rel (0) target = $region21
    $region20: #{tpu_custom_call.1} parent=1 // pred_region
      %39 = dma.done [#allocation7], 512
    $region21: #{tpu_custom_call.1} parent=1 // pred_fallthru
      _
    %v40 = vld [vmem:[#allocation3] sm:$0xff]
    %v41 = vld [vmem:[#allocation3 + $0x8] sm:$0xff]
    %v42 = vld [vmem:[#allocation3 + $0x10] sm:$0xff]
    %v43 = vld [vmem:[#allocation3 + $0x18] sm:$0xff]
    %v44 = vld [vmem:[#allocation6] sm:$0xff]
    %v45 = vld [vmem:[#allocation6 + $0x8] sm:$0xff]
    %v46 = vld [vmem:[#allocation6 + $0x10] sm:$0xff]
    %v47 = vld [vmem:[#allocation6 + $0x18] sm:$0xff]
    %v48 = vmul.f32 %v40, %v44
    %v49 = vmul.f32 %v41, %v45
    %v50 = vmul.f32 %v42, %v46
    %v51 = vmul.f32 %v43, %v47
    %s52 = sld [smem:[#allocation2]]
    %v53 = vstv %s52
    %v54 = vadd.f32 %v48, %v53
    %v55 = vadd.f32 %v49, %v53
    %v56 = vadd.f32 %v50, %v53
    %v57 = vadd.f32 %v51, %v53
    %58 = vst [vmem:[#allocation8] sm:$0xff] %v54
    %59 = vst [vmem:[#allocation8 + $0x8] sm:$0xff] %v55
    %60 = vst [vmem:[#allocation8 + $0x10] sm:$0xff] %v56
    %61 = vst [vmem:[#allocation8 + $0x18] sm:$0xff] %v57
    // Predicated region
    $region22: #{tpu_custom_call.1} parent=1 // pred_check
      _
    $region23: #{tpu_custom_call.1} parent=1 // pred_check_branch
      %63 = sbr.rel (0) target = $region25
    $region24: #{tpu_custom_call.1} parent=1 // pred_region
      %s65 = ssub.s32 512, 512
      %66 = vsyncadd [#allocation5], %s65
      %s68 = sshll.u32 [#allocation8], 4
      %s69 = int_to_ptr.vmem [resolvable:$true] %s68
      %71 = dma.vmem_to_hbm [thread:$0]  %s69, 512, %s3, [#allocation5]
    $region25: #{tpu_custom_call.1} parent=1 // pred_fallthru
      _
    // Predicated region
    $region26: #{tpu_custom_call.1} parent=1 // pred_check
      _
    $region27: #{tpu_custom_call.1} parent=1 // pred_check_branch
      %73 = sbr.rel (0) target = $region29
    $region28: #{tpu_custom_call.1} parent=1 // pred_region
      %74 = dma.done [#allocation5], 512
    $region29: #{tpu_custom_call.1} parent=1 // pred_fallthru
      _
    %75 = vsyncpa [#allocation4], 1
    %76 = vsyncpa [#allocation7], 1
    %77 = vsyncpa [#allocation5], 1

</llo_original>
